<compile_context>
chip_gen: v7x
topology: tpu7x:2x2x1
jax: 0.10.0
libtpu: 0.0.40
codegen_flags: <defaults>
</compile_context>

<pallas_src>
import functools

import jax
import jax.numpy as jnp
from jax.experimental import pallas as pl
from jax.experimental.pallas import tpu as pltpu

_LANE = 128
_SUBLANE = 8


def _round_up(x, m):
    return ((x + m - 1) // m) * m


def _largest_tile(dim, preferred, multiple):
    """Largest divisor of `dim` that is a multiple of `multiple` and <= `preferred`.

    `dim` must itself be a multiple of `multiple`. Never falls back to the
    full dim unless dim <= preferred, so a tile can never blow past VMEM.
    """
    if dim <= preferred:
        return dim
    best = multiple
    cand = multiple
    while cand <= preferred:
        if dim % cand == 0:
            best = cand
        cand += multiple
    return best


def _vmem_capacity_bytes():
    try:
        return int(pltpu.get_tpu_info().vmem_capacity_bytes)
    except Exception:
        return 64 * 1024 * 1024  # conservative default (v7x-sized VMEM)


_VMEM_CAP = _vmem_capacity_bytes()
if _VMEM_CAP >= 96 * 1024 * 1024:        # v5e / v6e: 128 MiB physical VMEM
    _TM_PREF, _TN_PREF, _TK_PREF = 512, 1024, 1024
else:                                     # v7x: 64 MiB physical VMEM
    _TM_PREF, _TN_PREF, _TK_PREF = 256, 512, 512
# Scoped VMEM limit: leave pipelining headroom below the physical capacity.
_VMEM_LIMIT = min(64 * 1024 * 1024, (_VMEM_CAP * 3) // 4)
# Per-step working-set budget (inputs + output tile, x2 for double buffering).
_STEP_BUDGET = int(_VMEM_LIMIT * 0.7)

_MIN_PALLAS_ROWS = 64   # below this, XLA's fused dot beats the kernel launch


# ----------------------------------------------------------------------------
# Kernels
# ----------------------------------------------------------------------------
def _linear_relu_fullk_kernel(x_ref, w_ref, o_ref):
    # x_ref: (tm, K) activation tile, w_ref: (K, tn) resident weight block,
    # o_ref: (tm, tn). Single matmul + ReLU + lane-dense store per step.
    x = x_ref[...]
    w = w_ref[...]
    if x.dtype != w.dtype:               # optional bf16 weight path
        x = x.astype(w.dtype)
    y = jnp.dot(x, w, preferred_element_type=jnp.float32)
    o_ref[...] = jnp.maximum(y, 0.0).astype(o_ref.dtype)


def _linear_relu_ktiled_kernel(x_ref, w_ref, o_ref):
    # Fallback for very large K: accumulate straight into the resident output
    # block (no VMEM acc scratch), ReLU applied in place on the last K step.
    k = pl.program_id(2)

    @pl.when(k == 0)
    def _():
        o_ref[...] = jnp.zeros_like(o_ref)

    x = x_ref[...]
    w = w_ref[...]
    if x.dtype != w.dtype:
        x = x.astype(w.dtype)
    o_ref[...] += jnp.dot(x, w, preferred_element_type=jnp.float32)

    @pl.when(k == pl.num_programs(2) - 1)
    def _():
        o_ref[...] = jnp.maximum(o_ref[...], 0.0)


# ----------------------------------------------------------------------------
# Tiling plan (runs at trace time on static shapes)
# ----------------------------------------------------------------------------
def _plan_tiles(batch, k, n_pad, x_bytes, w_bytes):
    """Returns (b_pad, k_pad, tm, tn, tk). tk == k_pad means weight-resident."""
    b_pad = _round_up(max(batch, _SUBLANE), _SUBLANE)
    tm = _largest_tile(b_pad, _TM_PREF, _SUBLANE)
    tn = _largest_tile(n_pad, _TN_PREF, _LANE)

    def fits(tk_):
        per_step = tm * tk_ * x_bytes + tk_ * tn * w_bytes + tm * tn * 4
        return 2 * per_step <= _STEP_BUDGET   # x2: double-buffered pipeline

    if fits(k):
        return b_pad, k, tm, tn, k            # full-K, weight-resident path

    k_pad = _round_up(k, _LANE)
    tk = _LANE
    cand = _largest_tile(k_pad, _TK_PREF, _LANE)
    while cand >= _LANE:
        if k_pad % cand == 0 and fits(cand):
            tk = cand
            break
        cand -= _LANE
    return b_pad, k_pad, tm, tn, tk


# ----------------------------------------------------------------------------
# Wrapper
# ----------------------------------------------------------------------------
@functools.partial(jax.jit, static_argnames=("out_dim",))
def linear_relu(x, wt, *, out_dim):
    """relu(x @ wt)[:, :out_dim] with wt pre-transposed to [in_dim, n_pad]."""
    batch, k = x.shape
    k_w, n_pad = wt.shape
    assert k == k_w

    # Tiny problems: MXU mostly idle, per-grid-step overhead dominates.
    if batch < _MIN_PALLAS_ROWS:
        y = jnp.dot(x, wt.astype(x.dtype), preferred_element_type=jnp.float32)
        return jnp.maximum(y, 0.0)[:, :out_dim]

    x_bytes = jnp.dtype(x.dtype).itemsize
    w_bytes = jnp.dtype(wt.dtype).itemsize
    b_pad, k_pad, tm, tn, tk = _plan_tiles(batch, k, n_pad, x_bytes, w_bytes)

    if b_pad != batch or k_pad != k:
        x = jnp.pad(x, ((0, b_pad - batch), (0, k_pad - k)))
    if k_pad != k:
        wt = jnp.pad(wt, ((0, k_pad - k), (0, 0)))

    m_tiles = b_pad // tm
    n_tiles = n_pad // tn

    if tk == k_pad:
        # Weight-resident full-K path. Grid = (N tiles, M tiles): the weight
        # index_map ignores the inner M axis -> each weight block DMA'd once
        # per call; x streams once per N tile (usually N tiles == 1).
        grid = (n_tiles, m_tiles)
        kernel = _linear_relu_fullk_kernel
        in_specs = [
            pl.BlockSpec((tm, k_pad), lambda j, i: (i, 0)),
            pl.BlockSpec((k_pad, tn), lambda j, i: (0, j)),
        ]
        out_spec = pl.BlockSpec((tm, tn), lambda j, i: (i, j))
        semantics = ("parallel", "parallel")
        bytes_accessed = (n_tiles * b_pad * k_pad * x_bytes
                          + k_pad * n_pad * w_bytes
                          + b_pad * n_pad * 4)
    else:
        # Huge-K fallback: K innermost ("arbitrary"), accumulate directly into
        # the resident output block.
        k_tiles = k_pad // tk
        grid = (n_tiles, m_tiles, k_tiles)
        kernel = _linear_relu_ktiled_kernel
        in_specs = [
            pl.BlockSpec((tm, tk), lambda j, i, kk: (i, kk)),
            pl.BlockSpec((tk, tn), lambda j, i, kk: (kk, j)),
        ]
        out_spec = pl.BlockSpec((tm, tn), lambda j, i, kk: (i, j))
        semantics = ("parallel", "parallel", "arbitrary")
        bytes_accessed = (n_tiles * b_pad * k_pad * x_bytes
                          + m_tiles * k_pad * n_pad * w_bytes
                          + b_pad * n_pad * 4)

    cost = pl.CostEstimate(
        flops=2 * b_pad * k_pad * n_pad,
        transcendentals=0,
        bytes_accessed=int(bytes_accessed),
    )

    y = pl.pallas_call(
        kernel,
        out_shape=jax.ShapeDtypeStruct((b_pad, n_pad), jnp.float32),
        grid_spec=pltpu.PrefetchScalarGridSpec(
            num_scalar_prefetch=0,
            grid=grid,
            in_specs=in_specs,
            out_specs=out_spec,
        ),
        compiler_params=pltpu.CompilerParams(
            dimension_semantics=semantics,
            vmem_limit_bytes=_VMEM_LIMIT,
        ),
        cost_estimate=cost,
    )(x, wt)

    return y[:batch, :out_dim]


# ----------------------------------------------------------------------------
# Module mirror
# ----------------------------------------------------------------------------
class FullyConnectedPallas:
    """Mirror of the PyTorch FullyConnected module (eval mode, bias=False)."""

    def __init__(self, input_dim, output_dim, dropout=0.0, use_bias=False,
                 share_weights=False, use_bf16=False, key=None):
        assert not use_bias, "reference default: bias=False"
        assert dropout == 0.0, "TODO(synk): dropout p>0 not implemented"
        self.input_dim = input_dim
        self.output_dim = output_dim
        self.share_weights = share_weights

        if key is None:
            key = jax.random.PRNGKey(0)
        k_u, k_i = jax.random.split(key)
        bound = 1.0 / (input_dim ** 0.5)
        # nn.Linear weight layout: [out_dim, in_dim]
        self.w_user = jax.random.uniform(
            k_u, (output_dim, input_dim), jnp.float32, -bound, bound)
        self.w_item = self.w_user if share_weights else jax.random.uniform(
            k_i, (output_dim, input_dim), jnp.float32, -bound, bound)

        # Pre-transpose ONCE to [in_dim, out_dim] and pad the output (lane)
        # axis to a multiple of 128 so the kernel's stores are lane-dense.
        self.padded_out_dim = _round_up(output_dim, _LANE)
        pad = self.padded_out_dim - output_dim
        w_dtype = jnp.bfloat16 if use_bf16 else jnp.float32

        def prep(w):
            wt = w.T                       # [in_dim, out_dim], copied once here
            if pad:
                wt = jnp.pad(wt, ((0, 0), (0, pad)))
            return wt.astype(w_dtype)

        self.wt_user = prep(self.w_user)
        self.wt_item = self.wt_user if share_weights else prep(self.w_item)

    def __call__(self, user_inputs, item_inputs):
        # dropout(p=0.0) == identity in eval/default config.
        # TODO(synk): when share_weights=True the two calls could be folded
        #             into a single kernel by concatenating along the M axis.
        user_out = linear_relu(user_inputs, self.wt_user, out_dim=self.output_dim)
        item_out = linear_relu(item_inputs, self.wt_item, out_dim=self.output_dim)
        return user_out, item_out


if __name__ == "__main__":
    key = jax.random.PRNGKey(0)
    k_mod, k_u, k_i = jax.random.split(key, 3)

    input_dim = 64
    output_dim = 96                       # not a multiple of 128 -> exercises lane padding
    user_batch = 256
    item_batch = 512                      # mismatched batches (negative sampling)

    model = FullyConnectedPallas(input_dim, output_dim, key=k_mod)

    user_inputs = jax.random.normal(k_u, (user_batch, input_dim), jnp.float32)
    item_inputs = jax.random.normal(k_i, (item_batch, input_dim), jnp.float32)

    user_out, item_out = model(user_inputs, item_inputs)
    jax.block_until_ready((user_out, item_out))

    # Cross-check against plain-JAX reference of the PyTorch semantics.
    ref_u = jnp.maximum(user_inputs @ model.w_user.T, 0.0)
    ref_i = jnp.maximum(item_inputs @ model.w_item.T, 0.0)
    assert user_out.shape == ref_u.shape and item_out.shape == ref_i.shape
    assert jnp.allclose(user_out, ref_u, atol=2e-5, rtol=1e-5)
    assert jnp.allclose(item_out, ref_i, atol=2e-5, rtol=1e-5)

    print("KERNEL_OK")
</pallas_src>

<mosaic_0001>
module attributes {stable_mosaic.version = 11 : i64} {
  func.func @_linear_relu_fullk_kernel(%arg0: i32, %arg1: i32, %arg2: memref<256x64xf32, #tpu.memory_space<vmem>>, %arg3: memref<64x128xf32, #tpu.memory_space<vmem>>, %arg4: memref<256x128xf32, #tpu.memory_space<vmem>>) attributes {dimension_semantics = [#tpu.dimension_semantics<parallel>, #tpu.dimension_semantics<parallel>], iteration_bounds = array<i64: 1, 1>, scalar_prefetch = 0 : i64, scratch_operands = 0 : i64, tpu.core_type = #tpu.core_type<tc>, window_params = [{transform_indices = @transform_0, window_bounds = array<i64: 256, 64>}, {transform_indices = @transform_1, window_bounds = array<i64: 64, 128>}, {transform_indices = @transform_2, window_bounds = array<i64: 256, 128>}]} {
    %c0 = arith.constant 0 : index
    %c0_0 = arith.constant 0 : index
    %0 = vector.load %arg2[%c0, %c0_0] : memref<256x64xf32, #tpu.memory_space<vmem>>, vector<256x64xf32>
    %c0_1 = arith.constant 0 : index
    %c0_2 = arith.constant 0 : index
    %1 = vector.load %arg3[%c0_1, %c0_2] : memref<64x128xf32, #tpu.memory_space<vmem>>, vector<64x128xf32>
    %cst = arith.constant dense<0.000000e+00> : vector<256x128xf32>
    %2 = tpu.matmul %0, %1, %cst {dimension_numbers = #tpu.dot_dimension_numbers<[1], [0], [0], [1], [0, 0, 1, 1], [], []>} : vector<256x64xf32>, vector<64x128xf32>, vector<256x128xf32> -> vector<256x128xf32>
    %cst_3 = arith.constant 0.000000e+00 : f32
    %3 = vector.broadcast %cst_3 : f32 to vector<256x128xf32>
    %4 = arith.maximumf %2, %3 : vector<256x128xf32>
    %c0_4 = arith.constant 0 : index
    %c0_5 = arith.constant 0 : index
    %5 = vector.load %arg4[%c0_4, %c0_5] : memref<256x128xf32, #tpu.memory_space<vmem>>, vector<256x128xf32>
    tpu.vector_store %arg4[%c0_4, %c0_5], %4 {strides = array<i32>} : memref<256x128xf32, #tpu.memory_space<vmem>>, vector<256x128xf32>,
    return
  }
  func.func @transform_0(%arg0: i32, %arg1: i32) -> (i32, i32) {
    %c0_i32 = arith.constant 0 : i32
    %c0_i32_0 = arith.constant 0 : i32
    return %arg1, %c0_i32 : i32, i32
  }
  func.func @transform_1(%arg0: i32, %arg1: i32) -> (i32, i32) {
    %c0_i32 = arith.constant 0 : i32
    %c0_i32_0 = arith.constant 0 : i32
    return %c0_i32, %arg0 : i32, i32
  }
  func.func @transform_2(%arg0: i32, %arg1: i32) -> (i32, i32) {
    %c0_i32 = arith.constant 0 : i32
    return %arg1, %arg0 : i32, i32
  }
}

</mosaic_0001>

<llo_original>
// kernel: linear_relu.1
$region0: #{linear_relu.1}
  #allocation0 [shape = 'u32[]', space=smem, size = 0x4, offset = 0x4, fixed_abs, tag = 'smem constant byte address 0x4 - core index']
  #allocation1 [shape = 'u32[144,128]{1,0:T(1,128)}', space=vmem, size = 0x12000, scoped, tag = 'internal scratch']
  %s0 = inlined_call_operand.vmem [shape: f32[256,64], index: 0, kind: input, shape index: {}]
  %s1 = inlined_call_operand.vmem [shape: f32[64,128], index: 1, kind: input, shape index: {}]
  %s2 = inlined_call_operand.vmem [shape: f32[256,128], index: 2, kind: output, shape index: {}]
  %s3 = sld [smem:[#allocation0]]
  $region18: #{linear_relu.1} parent=0
    _
  %s5 = ssub.s32 1, %s3
  %s6 = scalar_select 0, %s5, %s3
  // Predicated region
  $region2: #{linear_relu.1} parent=0 // pred_check
    _
  $region3: #{linear_relu.1} parent=0 // pred_check_branch
    %8 = sbr.rel (0) target = $region5
  $region4: #{linear_relu.1} parent=0 // pred_region
    _
  $region5: #{linear_relu.1} parent=0 // pred_fallthru
    _
  // Predicated region
  $region6: #{linear_relu.1} parent=0 // pred_check
    _
  $region7: #{linear_relu.1} parent=0 // pred_check_branch
    %10 = sbr.rel (0) target = $region9
  $region8: #{linear_relu.1} parent=0 // pred_region
    _
  $region9: #{linear_relu.1} parent=0 // pred_fallthru
    _
  %v11 = vld [vmem:[%s0] sm:$0xff]
  %v12 = vld [vmem:[%s0 + $0x8] sm:$0xff]
  %v13 = vld [vmem:[%s0 + $0x10] sm:$0xff]
  %v14 = vld [vmem:[%s0 + $0x18] sm:$0xff]
  %v15 = vld [vmem:[%s0 + $0x20] sm:$0xff]
  %v16 = vld [vmem:[%s0 + $0x28] sm:$0xff]
  %v17 = vld [vmem:[%s0 + $0x30] sm:$0xff]
  %v18 = vld [vmem:[%s0 + $0x38] sm:$0xff]
  %v19 = vld [vmem:[%s0 + $0x40] sm:$0xff]
  %v20 = vld [vmem:[%s0 + $0x48] sm:$0xff]
  %v21 = vld [vmem:[%s0 + $0x50] sm:$0xff]
  %v22 = vld [vmem:[%s0 + $0x58] sm:$0xff]
  %v23 = vld [vmem:[%s0 + $0x60] sm:$0xff]
  %v24 = vld [vmem:[%s0 + $0x68] sm:$0xff]
  %v25 = vld [vmem:[%s0 + $0x70] sm:$0xff]
  %v26 = vld [vmem:[%s0 + $0x78] sm:$0xff]
  %v27 = vld [vmem:[%s0 + $0x80] sm:$0xff]
  %v28 = vld [vmem:[%s0 + $0x88] sm:$0xff]
  %v29 = vld [vmem:[%s0 + $0x90] sm:$0xff]
  %v30 = vld [vmem:[%s0 + $0x98] sm:$0xff]
  %v31 = vld [vmem:[%s0 + $0xa0] sm:$0xff]
  %v32 = vld [vmem:[%s0 + $0xa8] sm:$0xff]
  %v33 = vld [vmem:[%s0 + $0xb0] sm:$0xff]
  %v34 = vld [vmem:[%s0 + $0xb8] sm:$0xff]
  %v35 = vld [vmem:[%s0 + $0xc0] sm:$0xff]
  %v36 = vld [vmem:[%s0 + $0xc8] sm:$0xff]
  %v37 = vld [vmem:[%s0 + $0xd0] sm:$0xff]
  %v38 = vld [vmem:[%s0 + $0xd8] sm:$0xff]
  %v39 = vld [vmem:[%s0 + $0xe0] sm:$0xff]
  %v40 = vld [vmem:[%s0 + $0xe8] sm:$0xff]
  %v41 = vld [vmem:[%s0 + $0xf0] sm:$0xff]
  %v42 = vld [vmem:[%s0 + $0xf8] sm:$0xff]
  %v43 = vld [vmem:[%s1] sm:$0xff]
  %v44 = vld [vmem:[%s1 + $0x8] sm:$0xff]
  %v45 = vld [vmem:[%s1 + $0x10] sm:$0xff]
  %v46 = vld [vmem:[%s1 + $0x18] sm:$0xff]
  %v47 = vld [vmem:[%s1 + $0x20] sm:$0xff]
  %v48 = vld [vmem:[%s1 + $0x28] sm:$0xff]
  %v49 = vld [vmem:[%s1 + $0x30] sm:$0xff]
  %v50 = vld [vmem:[%s1 + $0x38] sm:$0xff]
  %vm51 = vcmask 523264
  %v53 = vsel %vm51, %v11, 0
  %v56 = vsel %vm51, %v12, 0
  %v59 = vsel %vm51, %v13, 0
  %v62 = vsel %vm51, %v14, 0
  %v65 = vsel %vm51, %v15, 0
  %v68 = vsel %vm51, %v16, 0
  %v71 = vsel %vm51, %v17, 0
  %v74 = vsel %vm51, %v18, 0
  %v77 = vsel %vm51, %v19, 0
  %v80 = vsel %vm51, %v20, 0
  %v83 = vsel %vm51, %v21, 0
  %v86 = vsel %vm51, %v22, 0
  %v89 = vsel %vm51, %v23, 0
  %v92 = vsel %vm51, %v24, 0
  %v95 = vsel %vm51, %v25, 0
  %v98 = vsel %vm51, %v26, 0
  %v101 = vsel %vm51, %v27, 0
  %v104 = vsel %vm51, %v28, 0
  %v107 = vsel %vm51, %v29, 0
  %v110 = vsel %vm51, %v30, 0
  %v113 = vsel %vm51, %v31, 0
  %v116 = vsel %vm51, %v32, 0
  %v119 = vsel %vm51, %v33, 0
  %v122 = vsel %vm51, %v34, 0
  %v125 = vsel %vm51, %v35, 0
  %v128 = vsel %vm51, %v36, 0
  %v131 = vsel %vm51, %v37, 0
  %v134 = vsel %vm51, %v38, 0
  %v137 = vsel %vm51, %v39, 0
  %v140 = vsel %vm51, %v40, 0
  %v143 = vsel %vm51, %v41, 0
  %v146 = vsel %vm51, %v42, 0
  %148 = vmatprep.subr.mxu0 0.0
  %149 = vmatpush1.msra.mxu0 %v43
  %150 = vmatprep.subr.mxu0 0.0
  %151 = vmatpush1.msra.mxu0 %v44
  %152 = vmatprep.subr.mxu0 0.0
  %153 = vmatpush1.msra.mxu0 %v45
  %154 = vmatprep.subr.mxu0 0.0
  %155 = vmatpush1.msra.mxu0 %v46
  %156 = vmatprep.subr.mxu0 0.0
  %157 = vmatpush1.msra.mxu0 %v47
  %158 = vmatprep.subr.mxu0 0.0
  %159 = vmatpush1.msra.mxu0 %v48
  %160 = vmatprep.subr.mxu0 0.0
  %161 = vmatpush1.msra.mxu0 %v49
  %162 = vmatprep.subr.mxu0 0.0
  %163 = vmatpush1.msra.mxu0 %v50
  %164 = vmatprep.subr.mxu0 0.0
  %165 = vmatpush1.msra.mxu0 0.0
  %166 = vmatprep.subr.mxu0 0.0
  %167 = vmatpush1.msra.mxu0 0.0
  %168 = vmatprep.subr.mxu0 0.0
  %169 = vmatpush1.msra.mxu0 0.0
  %170 = vmatprep.subr.mxu0 0.0
  %171 = vmatpush1.msra.mxu0 0.0
  %172 = vmatprep.subr.mxu0 0.0
  %173 = vmatpush1.msra.mxu0 0.0
  %174 = vmatprep.subr.mxu0 0.0
  %175 = vmatpush1.msra.mxu0 0.0
  %176 = vmatprep.subr.mxu0 0.0
  %177 = vmatpush1.msra.mxu0 0.0
  %178 = vmatprep.subr.mxu0 0.0
  %179 = vmatpush1.msra.mxu0 0.0
  %180 = vmatprep.subr.mxu0 0.0
  %181 = vmatpush1.msra.mxu0 0.0
  %182 = vmatprep.subr.mxu0 0.0
  %183 = vmatpush1.msra.mxu0 0.0
  %184 = vmatprep.subr.mxu0 0.0
  %185 = vmatpush1.msra.mxu0 0.0
  %186 = vmatprep.subr.mxu0 0.0
  %187 = vmatpush1.msra.mxu0 0.0
  %188 = vmatprep.subr.mxu0 0.0
  %189 = vmatpush1.msra.mxu0 0.0
  %190 = vmatprep.subr.mxu0 0.0
  %191 = vmatpush1.msra.mxu0 0.0
  %192 = vmatprep.subr.mxu0 0.0
  %193 = vmatpush1.msra.mxu0 0.0
  %194 = vmatprep.subr.mxu0 0.0
  %195 = vmatpush1.msra.mxu0 0.0
  %196 = vmatprep.subr.mxu0 0.0
  %197 = vmatpush1.msra.mxu0 0.0
  %198 = vmatprep.subr.mxu0 0.0
  %199 = vmatpush1.msra.mxu0 0.0
  %200 = vmatprep.subr.mxu0 0.0
  %201 = vmatpush1.msra.mxu0 0.0
  %202 = vmatprep.subr.mxu0 0.0
  %203 = vmatpush1.msra.mxu0 0.0
  %204 = vmatprep.subr.mxu0 0.0
  %205 = vmatpush1.msra.mxu0 0.0
  %206 = vmatprep.subr.mxu0 0.0
  %207 = vmatpush1.msra.mxu0 0.0
  %208 = vmatprep.subr.mxu0 0.0
  %209 = vmatpush1.msra.mxu0 0.0
  %210 = vmatprep.subr.mxu0 0.0
  %211 = vmatpush1.msra.mxu0 0.0
  %212 = vmatprep.mubr.f32.mxu0 0.0
  %213 = vmatmul.mubr.f32.gmra.mrb[0].mxu0 %v53
  %v214 = vpop.f32.mrb[0].mxu0
  %v215 = vadd.f32 0.0, %v214
  %v216 = vpop.f32.mrb[0].mxu0
  %217 = vmatprep.mubr.f32.mxu0 0.0
  %218 = vmatmul.mubr.f32.gmra.mrb[0].mxu0 %v56
  %v219 = vpop.f32.mrb[0].mxu0
  %v220 = vadd.f32 0.0, %v219
  %v221 = vpop.f32.mrb[0].mxu0
  %222 = vmatprep.mubr.f32.mxu0 0.0
  %223 = vmatmul.mubr.f32.gmra.mrb[0].mxu0 %v59
  %v224 = vpop.f32.mrb[0].mxu0
  %v225 = vadd.f32 0.0, %v224
  %v226 = vpop.f32.mrb[0].mxu0
  %227 = vmatprep.mubr.f32.mxu0 0.0
  %228 = vmatmul.mubr.f32.gmra.mrb[0].mxu0 %v62
  %v229 = vpop.f32.mrb[0].mxu0
  %v230 = vadd.f32 0.0, %v229
  %v231 = vpop.f32.mrb[0].mxu0
  %232 = vmatprep.mubr.f32.mxu0 0.0
  %233 = vmatmul.mubr.f32.gmra.mrb[0].mxu0 %v65
  %v234 = vpop.f32.mrb[0].mxu0
  %v235 = vadd.f32 0.0, %v234
  %v236 = vpop.f32.mrb[0].mxu0
  %237 = vmatprep.mubr.f32.mxu0 0.0
  %238 = vmatmul.mubr.f32.gmra.mrb[0].mxu0 %v68
  %v239 = vpop.f32.mrb[0].mxu0
  %v240 = vadd.f32 0.0, %v239
  %v241 = vpop.f32.mrb[0].mxu0
  %242 = vmatprep.mubr.f32.mxu0 0.0
  %243 = vmatmul.mubr.f32.gmra.mrb[0].mxu0 %v71
  %v244 = vpop.f32.mrb[0].mxu0
  %v245 = vadd.f32 0.0, %v244
  %v246 = vpop.f32.mrb[0].mxu0
  %247 = vmatprep.mubr.f32.mxu0 0.0
  %248 = vmatmul.mubr.f32.gmra.mrb[0].mxu0 %v74
  %v249 = vpop.f32.mrb[0].mxu0
  %v250 = vadd.f32 0.0, %v249
  %v251 = vpop.f32.mrb[0].mxu0
  %252 = vmatprep.mubr.f32.mxu0 0.0
  %253 = vmatmul.mubr.f32.gmra.mrb[0].mxu0 %v77
  %v254 = vpop.f32.mrb[0].mxu0
  %v255 = vadd.f32 0.0, %v254
  %v256 = vpop.f32.mrb[0].mxu0
  %257 = vmatprep.mubr.f32.mxu0 0.0
  %258 = vmatmul.mubr.f32.gmra.mrb[0].mxu0 %v80
  %v259 = vpop.f32.mrb[0].mxu0
  %v260 = vadd.f32 0.0, %v259
  %v261 = vpop.f32.mrb[0].mxu0
  %262 = vmatprep.mubr.f32.mxu0 0.0
  %263 = vmatmul.mubr.f32.gmra.mrb[0].mxu0 %v83
  %v264 = vpop.f32.mrb[0].mxu0
  %v265 = vadd.f32 0.0, %v264
  %v266 = vpop.f32.mrb[0].mxu0
  %267 = vmatprep.mubr.f32.mxu0 0.0
  %268 = vmatmul.mubr.f32.gmra.mrb[0].mxu0 %v86
  %v269 = vpop.f32.mrb[0].mxu0
  %v270 = vadd.f32 0.0, %v269
  %v271 = vpop.f32.mrb[0].mxu0
  %272 = vmatprep.mubr.f32.mxu0 0.0
  %273 = vmatmul.mubr.f32.gmra.mrb[0].mxu0 %v89
  %v274 = vpop.f32.mrb[0].mxu0
  %v275 = vadd.f32 0.0, %v274
  %v276 = vpop.f32.mrb[0].mxu0
  %277 = vmatprep.mubr.f32.mxu0 0.0
  %278 = vmatmul.mubr.f32.gmra.mrb[0].mxu0 %v92
  %v279 = vpop.f32.mrb[0].mxu0
  %v280 = vadd.f32 0.0, %v279
  %v281 = vpop.f32.mrb[0].mxu0
  %282 = vmatprep.mubr.f32.mxu0 0.0
  %283 = vmatmul.mubr.f32.gmra.mrb[0].mxu0 %v95
  %v284 = vpop.f32.mrb[0].mxu0
  %v285 = vadd.f32 0.0, %v284
  %v286 = vpop.f32.mrb[0].mxu0
  %287 = vmatprep.mubr.f32.mxu0 0.0
  %288 = vmatmul.mubr.f32.gmra.mrb[0].mxu0 %v98
  %v289 = vpop.f32.mrb[0].mxu0
  %v290 = vadd.f32 0.0, %v289
  %v291 = vpop.f32.mrb[0].mxu0
  %292 = vmatprep.mubr.f32.mxu0 0.0
  %293 = vmatmul.mubr.f32.gmra.mrb[0].mxu0 %v101
  %v294 = vpop.f32.mrb[0].mxu0
  %v295 = vadd.f32 0.0, %v294
  %v296 = vpop.f32.mrb[0].mxu0
  %297 = vmatprep.mubr.f32.mxu0 0.0
  %298 = vmatmul.mubr.f32.gmra.mrb[0].mxu0 %v104
  %v299 = vpop.f32.mrb[0].mxu0
  %v300 = vadd.f32 0.0, %v299
  %v301 = vpop.f32.mrb[0].mxu0
  %302 = vmatprep.mubr.f32.mxu0 0.0
  %303 = vmatmul.mubr.f32.gmra.mrb[0].mxu0 %v107
  %v304 = vpop.f32.mrb[0].mxu0
  %v305 = vadd.f32 0.0, %v304
  %v306 = vpop.f32.mrb[0].mxu0
  %307 = vmatprep.mubr.f32.mxu0 0.0
  %308 = vmatmul.mubr.f32.gmra.mrb[0].mxu0 %v110
  %v309 = vpop.f32.mrb[0].mxu0
  %v310 = vadd.f32 0.0, %v309
  %v311 = vpop.f32.mrb[0].mxu0
  %312 = vmatprep.mubr.f32.mxu0 0.0
  %313 = vmatmul.mubr.f32.gmra.mrb[0].mxu0 %v113
  %v314 = vpop.f32.mrb[0].mxu0
  %v315 = vadd.f32 0.0, %v314
  %v316 = vpop.f32.mrb[0].mxu0
  %317 = vmatprep.mubr.f32.mxu0 0.0
  %318 = vmatmul.mubr.f32.gmra.mrb[0].mxu0 %v116
  %v319 = vpop.f32.mrb[0].mxu0
  %v320 = vadd.f32 0.0, %v319
  %v321 = vpop.f32.mrb[0].mxu0
  %322 = vmatprep.mubr.f32.mxu0 0.0
  %323 = vmatmul.mubr.f32.gmra.mrb[0].mxu0 %v119
  %v324 = vpop.f32.mrb[0].mxu0
  %v325 = vadd.f32 0.0, %v324
  %v326 = vpop.f32.mrb[0].mxu0
  %327 = vmatprep.mubr.f32.mxu0 0.0
  %328 = vmatmul.mubr.f32.gmra.mrb[0].mxu0 %v122
  %v329 = vpop.f32.mrb[0].mxu0
  %v330 = vadd.f32 0.0, %v329
  %v331 = vpop.f32.mrb[0].mxu0
  %332 = vmatprep.mubr.f32.mxu0 0.0
  %333 = vmatmul.mubr.f32.gmra.mrb[0].mxu0 %v125
  %v334 = vpop.f32.mrb[0].mxu0
  %v335 = vadd.f32 0.0, %v334
  %v336 = vpop.f32.mrb[0].mxu0
  %337 = vmatprep.mubr.f32.mxu0 0.0
  %338 = vmatmul.mubr.f32.gmra.mrb[0].mxu0 %v128
  %v339 = vpop.f32.mrb[0].mxu0
  %v340 = vadd.f32 0.0, %v339
  %v341 = vpop.f32.mrb[0].mxu0
  %342 = vmatprep.mubr.f32.mxu0 0.0
  %343 = vmatmul.mubr.f32.gmra.mrb[0].mxu0 %v131
  %v344 = vpop.f32.mrb[0].mxu0
  %v345 = vadd.f32 0.0, %v344
  %v346 = vpop.f32.mrb[0].mxu0
  %347 = vmatprep.mubr.f32.mxu0 0.0
  %348 = vmatmul.mubr.f32.gmra.mrb[0].mxu0 %v134
  %v349 = vpop.f32.mrb[0].mxu0
  %v350 = vadd.f32 0.0, %v349
  %v351 = vpop.f32.mrb[0].mxu0
  %352 = vmatprep.mubr.f32.mxu0 0.0
  %353 = vmatmul.mubr.f32.gmra.mrb[0].mxu0 %v137
  %v354 = vpop.f32.mrb[0].mxu0
  %v355 = vadd.f32 0.0, %v354
  %v356 = vpop.f32.mrb[0].mxu0
  %357 = vmatprep.mubr.f32.mxu0 0.0
  %358 = vmatmul.mubr.f32.gmra.mrb[0].mxu0 %v140
  %v359 = vpop.f32.mrb[0].mxu0
  %v360 = vadd.f32 0.0, %v359
  %v361 = vpop.f32.mrb[0].mxu0
  %362 = vmatprep.mubr.f32.mxu0 0.0
  %363 = vmatmul.mubr.f32.gmra.mrb[0].mxu0 %v143
  %v364 = vpop.f32.mrb[0].mxu0
  %v365 = vadd.f32 0.0, %v364
  %v366 = vpop.f32.mrb[0].mxu0
  %367 = vmatprep.mubr.f32.mxu0 0.0
  %368 = vmatmul.mubr.f32.gmra.mrb[0].mxu0 %v146
  %v369 = vpop.f32.mrb[0].mxu0
  %v370 = vadd.f32 0.0, %v369
  %v371 = vpop.f32.mrb[0].mxu0
  %372 = vdwg.mxu0
  %v373 = vmax.f32 %v215, 0.0
  %v374 = vmax.f32 %v220, 0.0
  %v375 = vmax.f32 %v225, 0.0
  %v376 = vmax.f32 %v230, 0.0
  %v377 = vmax.f32 %v235, 0.0
  %v378 = vmax.f32 %v240, 0.0
  %v379 = vmax.f32 %v245, 0.0
  %v380 = vmax.f32 %v250, 0.0
  %v381 = vmax.f32 %v255, 0.0
  %v382 = vmax.f32 %v260, 0.0
  %v383 = vmax.f32 %v265, 0.0
  %v384 = vmax.f32 %v270, 0.0
  %v385 = vmax.f32 %v275, 0.0
  %v386 = vmax.f32 %v280, 0.0
  %v387 = vmax.f32 %v285, 0.0
  %v388 = vmax.f32 %v290, 0.0
  %v389 = vmax.f32 %v295, 0.0
  %v390 = vmax.f32 %v300, 0.0
  %v391 = vmax.f32 %v305, 0.0
  %v392 = vmax.f32 %v310, 0.0
  %v393 = vmax.f32 %v315, 0.0
  %v394 = vmax.f32 %v320, 0.0
  %v395 = vmax.f32 %v325, 0.0
  %v396 = vmax.f32 %v330, 0.0
  %v397 = vmax.f32 %v335, 0.0
  %v398 = vmax.f32 %v340, 0.0
  %v399 = vmax.f32 %v345, 0.0
  %v400 = vmax.f32 %v350, 0.0
  %v401 = vmax.f32 %v355, 0.0
  %v402 = vmax.f32 %v360, 0.0
  %v403 = vmax.f32 %v365, 0.0
  %v404 = vmax.f32 %v370, 0.0
  %405 = vst [vmem:[%s2] sm:$0xff] %v373
  %406 = vst [vmem:[%s2 + $0x8] sm:$0xff] %v374
  %407 = vst [vmem:[%s2 + $0x10] sm:$0xff] %v375
  %408 = vst [vmem:[%s2 + $0x18] sm:$0xff] %v376
  %409 = vst [vmem:[%s2 + $0x20] sm:$0xff] %v377
  %410 = vst [vmem:[%s2 + $0x28] sm:$0xff] %v378
  %411 = vst [vmem:[%s2 + $0x30] sm:$0xff] %v379
  %412 = vst [vmem:[%s2 + $0x38] sm:$0xff] %v380
  %413 = vst [vmem:[%s2 + $0x40] sm:$0xff] %v381
  %414 = vst [vmem:[%s2 + $0x48] sm:$0xff] %v382
  %415 = vst [vmem:[%s2 + $0x50] sm:$0xff] %v383
  %416 = vst [vmem:[%s2 + $0x58] sm:$0xff] %v384
  %417 = vst [vmem:[%s2 + $0x60] sm:$0xff] %v385
  %418 = vst [vmem:[%s2 + $0x68] sm:$0xff] %v386
  %419 = vst [vmem:[%s2 + $0x70] sm:$0xff] %v387
  %420 = vst [vmem:[%s2 + $0x78] sm:$0xff] %v388
  %421 = vst [vmem:[%s2 + $0x80] sm:$0xff] %v389
  %422 = vst [vmem:[%s2 + $0x88] sm:$0xff] %v390
  %423 = vst [vmem:[%s2 + $0x90] sm:$0xff] %v391
  %424 = vst [vmem:[%s2 + $0x98] sm:$0xff] %v392
  %425 = vst [vmem:[%s2 + $0xa0] sm:$0xff] %v393
  %426 = vst [vmem:[%s2 + $0xa8] sm:$0xff] %v394
  %427 = vst [vmem:[%s2 + $0xb0] sm:$0xff] %v395
  %428 = vst [vmem:[%s2 + $0xb8] sm:$0xff] %v396
  %429 = vst [vmem:[%s2 + $0xc0] sm:$0xff] %v397
  %430 = vst [vmem:[%s2 + $0xc8] sm:$0xff] %v398
  %431 = vst [vmem:[%s2 + $0xd0] sm:$0xff] %v399
  %432 = vst [vmem:[%s2 + $0xd8] sm:$0xff] %v400
  %433 = vst [vmem:[%s2 + $0xe0] sm:$0xff] %v401
  %434 = vst [vmem:[%s2 + $0xe8] sm:$0xff] %v402
  %435 = vst [vmem:[%s2 + $0xf0] sm:$0xff] %v403
  %436 = vst [vmem:[%s2 + $0xf8] sm:$0xff] %v404
  // Predicated region
  $region10: #{linear_relu.1} parent=0 // pred_check
    _
  $region11: #{linear_relu.1} parent=0 // pred_check_branch
    %438 = sbr.rel (0) target = $region13
  $region12: #{linear_relu.1} parent=0 // pred_region
    _
  $region13: #{linear_relu.1} parent=0 // pred_fallthru
    _
  // Predicated region
  $region14: #{linear_relu.1} parent=0 // pred_check
    _
  $region15: #{linear_relu.1} parent=0 // pred_check_branch
    %440 = sbr.rel (0) target = $region17
  $region16: #{linear_relu.1} parent=0 // pred_region
    _
  $region17: #{linear_relu.1} parent=0 // pred_fallthru
    _

</llo_original>
